<compile_context>
chip_gen: v5e
topology: v5e:2x2
jax: 0.10.0
libtpu: 0.0.40
codegen_flags: <defaults>
</compile_context>

<pallas_src>
import functools

import jax
import jax.numpy as jnp
from jax.experimental import pallas as pl
from jax.experimental.pallas import tpu as pltpu


# ----------------------------------------------------------------------------
# helpers
# ----------------------------------------------------------------------------
def _round_up(x, m):
    return (x + m - 1) // m * m


def _pad_dim(d):
    """Pad a matmul K/N dimension: multiples of 256 when >=256, else 128."""
    dp = _round_up(d, 128)
    if dp >= 256:
        return _round_up(d, 256)
    return dp


_MAX_FUSED_ROWS = 1024  # fused (single-M-tile) conv+BN path row limit


# ----------------------------------------------------------------------------
# Pallas kernels
# ----------------------------------------------------------------------------
def _conv_bn_fused_kernel(x_ref, w_ref, g_ref, b_ref, *rest,
                          m_valid, eps, relu, has_res):
    """Tiled matmul (accumulate into o_ref over K) + BN/residual/ReLU epilogue."""
    if has_res:
        r_ref, o_ref = rest
    else:
        (o_ref,) = rest

    k = pl.program_id(1)

    @pl.when(k == 0)
    def _():
        o_ref[...] = jnp.zeros_like(o_ref)

    o_ref[...] += jnp.dot(x_ref[...], w_ref[...],
                          preferred_element_type=jnp.float32)

    @pl.when(k == pl.num_programs(1) - 1)
    def _():
        y = o_ref[...]
        # Exclude padded rows from the batch statistics.
        rows = jax.lax.broadcasted_iota(jnp.int32, y.shape, 0)
        mask = (rows < m_valid).astype(jnp.float32)
        inv_m = 1.0 / float(m_valid)
        mean = jnp.sum(y * mask, axis=0, keepdims=True) * inv_m
        var = jnp.sum(jnp.square(y - mean) * mask, axis=0, keepdims=True) * inv_m
        out = (y - mean) * jax.lax.rsqrt(var + eps)
        out = out * g_ref[...] + b_ref[...]
        if has_res:
            out = out + r_ref[...]
        if relu:
            out = jnp.maximum(out, 0.0)
        o_ref[...] = out


def _conv_bn_fused(patches_p, w_mat, gamma_p, beta_p, residual_p, relu, m_valid):
    Mp, Kp = patches_p.shape
    _, Np = w_mat.shape
    tk = 256 if Kp >= 256 else Kp
    tn = 256 if Np >= 256 else Np
    has_res = residual_p is not None

    kernel = functools.partial(_conv_bn_fused_kernel, m_valid=m_valid,
                               eps=1e-5, relu=relu, has_res=has_res)
    in_specs = [
        pl.BlockSpec((Mp, tk), lambda j, k: (0, k)),
        pl.BlockSpec((tk, tn), lambda j, k: (k, j)),
        pl.BlockSpec((1, tn), lambda j, k: (0, j)),
        pl.BlockSpec((1, tn), lambda j, k: (0, j)),
    ]
    args = [patches_p, w_mat, gamma_p, beta_p]
    if has_res:
        in_specs.append(pl.BlockSpec((Mp, tn), lambda j, k: (0, j)))
        args.append(residual_p)

    return pl.pallas_call(
        kernel,
        out_shape=jax.ShapeDtypeStruct((Mp, Np), jnp.float32),
        grid_spec=pltpu.PrefetchScalarGridSpec(
            num_scalar_prefetch=0,
            grid=(Np // tn, Kp // tk),
            in_specs=in_specs,
            out_specs=pl.BlockSpec((Mp, tn), lambda j, k: (0, j)),
        ),
        compiler_params=pltpu.CompilerParams(
            dimension_semantics=("parallel", "arbitrary")),
    )(*args)


def _matmul_kernel(x_ref, w_ref, o_ref):
    """M/N/K-tiled matmul, accumulating directly into the resident output block."""
    @pl.when(pl.program_id(2) == 0)
    def _():
        o_ref[...] = jnp.zeros_like(o_ref)

    o_ref[...] += jnp.dot(x_ref[...], w_ref[...],
                          preferred_element_type=jnp.float32)


def _matmul_tiled(patches_p, w_mat, tm):
    Mp, Kp = patches_p.shape
    _, Np = w_mat.shape
    tk = 256 if Kp >= 256 else Kp
    tn = 256 if Np >= 256 else Np
    return pl.pallas_call(
        _matmul_kernel,
        out_shape=jax.ShapeDtypeStruct((Mp, Np), jnp.float32),
        grid_spec=pltpu.PrefetchScalarGridSpec(
            num_scalar_prefetch=0,
            grid=(Mp // tm, Np // tn, Kp // tk),
            in_specs=[pl.BlockSpec((tm, tk), lambda i, j, k: (i, k)),
                      pl.BlockSpec((tk, tn), lambda i, j, k: (k, j))],
            out_specs=pl.BlockSpec((tm, tn), lambda i, j, k: (i, j)),
        ),
        compiler_params=pltpu.CompilerParams(
            dimension_semantics=("parallel", "parallel", "arbitrary")),
    )(patches_p, w_mat)


def _bn_kernel(x_ref, g_ref, b_ref, *rest, eps, relu, has_res):
    """Channel-tiled train-mode BN (+residual)(+ReLU); exact per-channel stats."""
    if has_res:
        r_ref, o_ref = rest
    else:
        (o_ref,) = rest
    x = x_ref[...]
    mean = jnp.mean(x, axis=0, keepdims=True)
    var = jnp.mean(jnp.square(x - mean), axis=0, keepdims=True)
    y = (x - mean) * jax.lax.rsqrt(var + eps)
    y = y * g_ref[...] + b_ref[...]
    if has_res:
        y = y + r_ref[...]
    if relu:
        y = jnp.maximum(y, 0.0)
    o_ref[...] = y


def _bn_tiled(x2d, gamma_p, beta_p, residual, relu):
    # TODO(synk): for extremely large row counts a two-pass (cross-tile) BN
    #             reduction would bound VMEM further; not needed at these sizes.
    M, Cp = x2d.shape
    cn = 256 if Cp >= 256 else Cp
    has_res = residual is not None
    kernel = functools.partial(_bn_kernel, eps=1e-5, relu=relu, has_res=has_res)
    in_specs = [pl.BlockSpec((M, cn), lambda j: (0, j)),
                pl.BlockSpec((1, cn), lambda j: (0, j)),
                pl.BlockSpec((1, cn), lambda j: (0, j))]
    args = [x2d, gamma_p, beta_p]
    if has_res:
        in_specs.append(pl.BlockSpec((M, cn), lambda j: (0, j)))
        args.append(residual)
    return pl.pallas_call(
        kernel,
        out_shape=jax.ShapeDtypeStruct((M, Cp), jnp.float32),
        grid_spec=pltpu.PrefetchScalarGridSpec(
            num_scalar_prefetch=0,
            grid=(Cp // cn,),
            in_specs=in_specs,
            out_specs=pl.BlockSpec((M, cn), lambda j: (0, j))),
        compiler_params=pltpu.CompilerParams(
            dimension_semantics=("parallel",)),
    )(*args)


def _max9_kernel(*refs):
    o_ref = refs[-1]
    m = refs[0][...]
    for r in refs[1:9]:
        m = jnp.maximum(m, r[...])
    o_ref[...] = m


def maxpool_3x3_s2_p1(x):
    """MaxPool2d(kernel=3, stride=2, padding=1) on NHWC, row-tiled running max."""
    N, H, W, C = x.shape
    xp = jnp.pad(x, ((0, 0), (1, 1), (1, 1), (0, 0)),
                 constant_values=-jnp.inf)
    Ho = (H + 2 - 3) // 2 + 1
    Wo = (W + 2 - 3) // 2 + 1
    R = N * Ho * Wo
    views = []
    for i in range(3):
        for j in range(3):
            views.append(xp[:, i:i + 2 * Ho:2, j:j + 2 * Wo:2, :].reshape(R, C))

    Rp = _round_up(R, 8)
    if Rp > 1024:
        tr = 1024
        Rp = _round_up(R, tr)
    else:
        tr = Rp
    if Rp != R:
        views = [jnp.pad(v, ((0, Rp - R), (0, 0)),
                         constant_values=-jnp.inf) for v in views]

    out = pl.pallas_call(
        _max9_kernel,
        out_shape=jax.ShapeDtypeStruct((Rp, C), jnp.float32),
        grid_spec=pltpu.PrefetchScalarGridSpec(
            num_scalar_prefetch=0,
            grid=(Rp // tr,),
            in_specs=[pl.BlockSpec((tr, C), lambda i: (i, 0))] * 9,
            out_specs=pl.BlockSpec((tr, C), lambda i: (i, 0))),
        compiler_params=pltpu.CompilerParams(
            dimension_semantics=("parallel",)),
    )(*views)
    return out[:R].reshape(N, Ho, Wo, C)


# ----------------------------------------------------------------------------
# Conv = (cheap) im2col + fused Pallas matmul/BN/ReLU/residual
# ----------------------------------------------------------------------------
def _im2col(x, kh, kw, stride, pad):
    N, H, W, C = x.shape
    if pad > 0:
        x = jnp.pad(x, ((0, 0), (pad, pad), (pad, pad), (0, 0)))
    Ho = (H + 2 * pad - kh) // stride + 1
    Wo = (W + 2 * pad - kw) // stride + 1
    if kh == 1 and kw == 1 and stride == 1:
        return x.reshape(N * H * W, C), Ho, Wo
    cols = []
    for i in range(kh):
        for j in range(kw):
            cols.append(x[:, i:i + stride * Ho:stride, j:j + stride * Wo:stride, :])
    patches = jnp.concatenate(cols, axis=-1)            # (N, Ho, Wo, kh*kw*C)
    # TODO(synk): the 3x3 im2col expansion could be folded into the matmul grid
    #             (kh,kw offsets as extra grid axes) to avoid materializing it.
    return patches.reshape(N * Ho * Wo, kh * kw * C), Ho, Wo


def pack_conv(w_oihw):
    """Pack an OIHW conv weight into a padded bf16 (Kp, Np) matmul matrix, once."""
    O, I, kh, kw = w_oihw.shape
    K = kh * kw * I
    w_mat = jnp.transpose(w_oihw, (2, 3, 1, 0)).reshape(K, O)
    Kp, Np = _pad_dim(K), _pad_dim(O)
    w_mat = jnp.pad(w_mat, ((0, Kp - K), (0, Np - O))).astype(jnp.bfloat16)
    return {"w": w_mat, "kh": kh, "kw": kw, "oc": O}


def conv_bn(x, pw, gamma, beta, stride, pad, relu, residual=None):
    """Conv2d(bias=False, groups=1) + train-mode BatchNorm2d(+residual)(+ReLU)."""
    N = x.shape[0]
    kh, kw, O = pw["kh"], pw["kw"], pw["oc"]
    w_mat = pw["w"]
    Kp, Np = w_mat.shape

    patches, Ho, Wo = _im2col(x.astype(jnp.bfloat16), kh, kw, stride, pad)
    M, K = patches.shape

    gamma_p = jnp.pad(gamma, (0, Np - O)).reshape(1, Np)
    beta_p = jnp.pad(beta, (0, Np - O)).reshape(1, Np)

    if _round_up(M, 8) <= _MAX_FUSED_ROWS:
        # Fused path: single M tile, BN/residual/ReLU inside the matmul epilogue.
        Mp = _round_up(M, 8)
        patches_p = jnp.pad(patches, ((0, Mp - M), (0, Kp - K)))
        res_p = None
        if residual is not None:
            res_p = jnp.pad(residual.reshape(M, O),
                            ((0, Mp - M), (0, Np - O)))
        out = _conv_bn_fused(patches_p, w_mat, gamma_p, beta_p, res_p,
                             relu, M)[:M, :O]
    else:
        # General path: M/N/K-tiled matmul + channel-tiled BN (stats over all M).
        tm = 256
        Mp = _round_up(M, tm)
        patches_p = jnp.pad(patches, ((0, Mp - M), (0, Kp - K)))
        y = _matmul_tiled(patches_p, w_mat, tm)[:M, :]
        res_p = None
        if residual is not None:
            res_p = jnp.pad(residual.reshape(M, O), ((0, 0), (0, Np - O)))
        out = _bn_tiled(y, gamma_p, beta_p, res_p, relu)[:, :O]

    return out.reshape(N, Ho, Wo, O)


# ----------------------------------------------------------------------------
# Parameter construction (deterministic, matching torch module shapes)
# ----------------------------------------------------------------------------
def make_resnet_params(key, layers, num_classes):
    expansion = 4  # Bottleneck
    params = {}
    kc = [0]

    def nk():
        kc[0] += 1
        return jax.random.fold_in(key, kc[0])

    def conv(o, i, kh, kw):
        fan_out = o * kh * kw
        std = (2.0 / fan_out) ** 0.5
        w = jax.random.normal(nk(), (o, i, kh, kw), jnp.float32) * std
        return pack_conv(w)

    params["conv1"] = conv(64, 3, 7, 7)
    params["bn1_g"] = jnp.ones((64,), jnp.float32)
    params["bn1_b"] = jnp.zeros((64,), jnp.float32)

    inplanes = 64
    features = []
    for planes, blocks, stage_stride in zip([64, 128, 256, 512], layers,
                                            [1, 2, 2, 2]):
        for b in range(blocks):
            stride = stage_stride if b == 0 else 1
            width = planes  # groups=1, base_width=64
            blk = {"stride": stride}
            blk["conv1"] = conv(width, inplanes, 1, 1)
            blk["bn1_g"] = jnp.ones((width,), jnp.float32)
            blk["bn1_b"] = jnp.zeros((width,), jnp.float32)
            blk["conv2"] = conv(width, width, 3, 3)       # choice[0], groups=1
            blk["bn2_g"] = jnp.ones((width,), jnp.float32)
            blk["bn2_b"] = jnp.zeros((width,), jnp.float32)
            blk["conv3"] = conv(planes * expansion, width, 1, 1)
            blk["bn3_g"] = jnp.ones((planes * expansion,), jnp.float32)
            blk["bn3_b"] = jnp.zeros((planes * expansion,), jnp.float32)
            if stride != 1 or inplanes != planes * expansion:
                blk["down"] = conv(planes * expansion, inplanes, 1, 1)
                blk["dbn_g"] = jnp.ones((planes * expansion,), jnp.float32)
                blk["dbn_b"] = jnp.zeros((planes * expansion,), jnp.float32)
            inplanes = planes * expansion
            features.append(blk)
    params["features"] = features

    params["fc_w"] = (jax.random.normal(nk(), (num_classes, 512 * expansion),
                                        jnp.float32) * 0.01)
    params["fc_b"] = jnp.zeros((num_classes,), jnp.float32)
    return params


# ----------------------------------------------------------------------------
# Forward pass
# ----------------------------------------------------------------------------
def bottleneck_forward(p, x, arch_id):
    if arch_id != 0:
        raise ValueError("only choice[0] (groups=1) exists before grow()")
    identity = x
    out = conv_bn(x, p["conv1"], p["bn1_g"], p["bn1_b"],
                  stride=1, pad=0, relu=True)
    out = conv_bn(out, p["conv2"], p["bn2_g"], p["bn2_b"],
                  stride=p["stride"], pad=1, relu=True)
    if "down" in p:
        identity = conv_bn(x, p["down"], p["dbn_g"], p["dbn_b"],
                           stride=p["stride"], pad=0, relu=False)
    out = conv_bn(out, p["conv3"], p["bn3_g"], p["bn3_b"],
                  stride=1, pad=0, relu=True, residual=identity)
    return out


def resnet_forward(params, x_nchw, architecture):
    x = jnp.transpose(x_nchw.astype(jnp.float32), (0, 2, 3, 1))  # NCHW -> NHWC
    # stem: 7x7 s2 conv + BN + ReLU (one fused Pallas call) + 3x3 s2 maxpool
    x = conv_bn(x, params["conv1"], params["bn1_g"], params["bn1_b"],
                stride=2, pad=3, relu=True)
    x = maxpool_3x3_s2_p1(x)
    for p, arch_id in zip(params["features"], architecture):
        x = bottleneck_forward(p, x, arch_id)
    # adaptive avg pool to (1,1) + flatten
    N, H, W, C = x.shape
    x = jnp.mean(x.reshape(N, H * W, C), axis=1)                 # (N, C)
    # FC head: tiny (batch x 2048) matmul -> plain XLA per perf review
    # (a Pallas call here would be pure launch/DMA overhead at 8/256 MXU rows).
    logits = jnp.dot(x, params["fc_w"].T) + params["fc_b"]
    return logits


# ----------------------------------------------------------------------------
if __name__ == "__main__":
    key = jax.random.PRNGKey(0)
    layers = [1, 1, 1, 1]           # small Bottleneck ResNet
    num_classes = 10
    params = make_resnet_params(key, layers, num_classes)

    x = jax.random.normal(jax.random.fold_in(key, 999), (2, 3, 16, 16),
                          jnp.float32)                     # NCHW like torch
    architecture = tuple(0 for _ in range(sum(layers)))    # get_origin_arch()

    logits = resnet_forward(params, x, architecture)
    logits = jax.block_until_ready(logits)

    assert logits.shape == (2, num_classes), logits.shape
    assert bool(jnp.all(jnp.isfinite(logits)))
    print("KERNEL_OK")
</pallas_src>

<mosaic_0001>
module attributes {stable_mosaic.version = 11 : i64} {
  func.func @_conv_bn_fused_kernel(%arg0: i32, %arg1: i32, %arg2: memref<128x256xbf16, #tpu.memory_space<vmem>>, %arg3: memref<256x128xbf16, #tpu.memory_space<vmem>>, %arg4: memref<1x128xf32, #tpu.memory_space<vmem>>, %arg5: memref<1x128xf32, #tpu.memory_space<vmem>>, %arg6: memref<128x128xf32, #tpu.memory_space<vmem>>) attributes {dimension_semantics = [#tpu.dimension_semantics<parallel>, #tpu.dimension_semantics<arbitrary>], iteration_bounds = array<i64: 1, 1>, scalar_prefetch = 0 : i64, scratch_operands = 0 : i64, tpu.core_type = #tpu.core_type<tc>, window_params = [{transform_indices = @transform_0, window_bounds = array<i64: 128, 256>}, {transform_indices = @transform_1, window_bounds = array<i64: 256, 128>}, {transform_indices = @transform_2, window_bounds = array<i64: 1, 128>}, {transform_indices = @transform_3, window_bounds = array<i64: 1, 128>}, {transform_indices = @transform_4, window_bounds = array<i64: 128, 128>}]} {
    %c0_i32 = arith.constant 0 : i32
    %0 = arith.cmpi eq, %arg1, %c0_i32 : i32
    %1 = arith.extui %0 : i1 to i32
    %c0_i32_0 = arith.constant 0 : i32
    %2 = arith.cmpi ne, %1, %c0_i32_0 : i32
    scf.if %2 {
      %cst_10 = arith.constant 0.000000e+00 : f32
      %12 = vector.broadcast %cst_10 : f32 to vector<128x128xf32>
      %c0_11 = arith.constant 0 : index
      %c0_12 = arith.constant 0 : index
      %13 = vector.load %arg6[%c0_11, %c0_12] : memref<128x128xf32, #tpu.memory_space<vmem>>, vector<128x128xf32>
      tpu.vector_store %arg6[%c0_11, %c0_12], %12 {strides = array<i32>} : memref<128x128xf32, #tpu.memory_space<vmem>>, vector<128x128xf32>,
    } else {
    }
    %c0 = arith.constant 0 : index
    %c0_1 = arith.constant 0 : index
    %3 = vector.load %arg6[%c0, %c0_1] : memref<128x128xf32, #tpu.memory_space<vmem>>, vector<128x128xf32>
    %c0_2 = arith.constant 0 : index
    %c0_3 = arith.constant 0 : index
    %4 = vector.load %arg2[%c0_2, %c0_3] : memref<128x256xbf16, #tpu.memory_space<vmem>>, vector<128x256xbf16>
    %c0_4 = arith.constant 0 : index
    %c0_5 = arith.constant 0 : index
    %5 = vector.load %arg3[%c0_4, %c0_5] : memref<256x128xbf16, #tpu.memory_space<vmem>>, vector<256x128xbf16>
    %cst = arith.constant dense<0.000000e+00> : vector<128x128xf32>
    %6 = tpu.matmul %4, %5, %cst {dimension_numbers = #tpu.dot_dimension_numbers<[1], [0], [0], [1], [0, 0, 1, 1], [], []>} : vector<128x256xbf16>, vector<256x128xbf16>, vector<128x128xf32> -> vector<128x128xf32>
    %7 = arith.addf %3, %6 : vector<128x128xf32>
    %c0_6 = arith.constant 0 : index
    %c0_7 = arith.constant 0 : index
    %8 = vector.load %arg6[%c0_6, %c0_7] : memref<128x128xf32, #tpu.memory_space<vmem>>, vector<128x128xf32>
    tpu.vector_store %arg6[%c0_6, %c0_7], %7 {strides = array<i32>} : memref<128x128xf32, #tpu.memory_space<vmem>>, vector<128x128xf32>,
    %c0_i32_8 = arith.constant 0 : i32
    %9 = arith.cmpi eq, %arg1, %c0_i32_8 : i32
    %10 = arith.extui %9 : i1 to i32
    %c0_i32_9 = arith.constant 0 : i32
    %11 = arith.cmpi ne, %10, %c0_i32_9 : i32
    scf.if %11 {
      %c0_10 = arith.constant 0 : index
      %c0_11 = arith.constant 0 : index
      %12 = vector.load %arg6[%c0_10, %c0_11] : memref<128x128xf32, #tpu.memory_space<vmem>>, vector<128x128xf32>
      %13 = tpu.iota {dimensions = array<i32: 0>} : vector<128x128xi32>
      %c128_i32 = arith.constant 128 : i32
      %14 = vector.broadcast %c128_i32 : i32 to vector<128x128xi32>
      %15 = arith.cmpi slt, %13, %14 : vector<128x128xi32>
      %16 = arith.extui %15 : vector<128x128xi1> to vector<128x128xi32>
      %17 = arith.sitofp %16 : vector<128x128xi32> to vector<128x128xf32>
      %18 = arith.mulf %12, %17 : vector<128x128xf32>
      %cst_12 = arith.constant dense<0.000000e+00> : vector<128xf32>
      %19 = vector.multi_reduction <add>, %18, %cst_12 [0] : vector<128x128xf32> to vector<128xf32>
      %20 = vector.shape_cast %19 : vector<128xf32> to vector<1x128xf32>
      %cst_13 = arith.constant 7.812500e-03 : f32
      %21 = vector.broadcast %cst_13 : f32 to vector<1x128xf32>
      %22 = arith.mulf %20, %21 : vector<1x128xf32>
      %23 = vector.broadcast %22 : vector<1x128xf32> to vector<128x128xf32>
      %24 = arith.subf %12, %23 : vector<128x128xf32>
      %25 = arith.mulf %24, %24 : vector<128x128xf32>
      %26 = arith.mulf %25, %17 : vector<128x128xf32>
      %cst_14 = arith.constant dense<0.000000e+00> : vector<128xf32>
      %27 = vector.multi_reduction <add>, %26, %cst_14 [0] : vector<128x128xf32> to vector<128xf32>
      %28 = vector.shape_cast %27 : vector<128xf32> to vector<1x128xf32>
      %cst_15 = arith.constant 7.812500e-03 : f32
      %29 = vector.broadcast %cst_15 : f32 to vector<1x128xf32>
      %30 = arith.mulf %28, %29 : vector<1x128xf32>
      %31 = vector.broadcast %22 : vector<1x128xf32> to vector<128x128xf32>
      %32 = arith.subf %12, %31 : vector<128x128xf32>
      %cst_16 = arith.constant 9.99999974E-6 : f32
      %33 = vector.broadcast %cst_16 : f32 to vector<1x128xf32>
      %34 = arith.addf %30, %33 : vector<1x128xf32>
      %35 = math.rsqrt %34 : vector<1x128xf32>
      %36 = vector.broadcast %35 : vector<1x128xf32> to vector<128x128xf32>
      %37 = arith.mulf %32, %36 : vector<128x128xf32>
      %c0_17 = arith.constant 0 : index
      %c0_18 = arith.constant 0 : index
      %38 = vector.load %arg4[%c0_17, %c0_18] : memref<1x128xf32, #tpu.memory_space<vmem>>, vector<1x128xf32>
      %39 = vector.broadcast %38 : vector<1x128xf32> to vector<128x128xf32>
      %40 = arith.mulf %37, %39 : vector<128x128xf32>
      %c0_19 = arith.constant 0 : index
      %c0_20 = arith.constant 0 : index
      %41 = vector.load %arg5[%c0_19, %c0_20] : memref<1x128xf32, #tpu.memory_space<vmem>>, vector<1x128xf32>
      %42 = vector.broadcast %41 : vector<1x128xf32> to vector<128x128xf32>
      %43 = arith.addf %40, %42 : vector<128x128xf32>
      %cst_21 = arith.constant 0.000000e+00 : f32
      %44 = vector.broadcast %cst_21 : f32 to vector<128x128xf32>
      %45 = arith.maximumf %43, %44 : vector<128x128xf32>
      %c0_22 = arith.constant 0 : index
      %c0_23 = arith.constant 0 : index
      %46 = vector.load %arg6[%c0_22, %c0_23] : memref<128x128xf32, #tpu.memory_space<vmem>>, vector<128x128xf32>
      tpu.vector_store %arg6[%c0_22, %c0_23], %45 {strides = array<i32>} : memref<128x128xf32, #tpu.memory_space<vmem>>, vector<128x128xf32>,
    } else {
    }
    return
  }
  func.func @transform_0(%arg0: i32, %arg1: i32) -> (i32, i32) {
    %c0_i32 = arith.constant 0 : i32
    %c0_i32_0 = arith.constant 0 : i32
    return %c0_i32, %arg1 : i32, i32
  }
  func.func @transform_1(%arg0: i32, %arg1: i32) -> (i32, i32) {
    %c0_i32 = arith.constant 0 : i32
    return %arg1, %arg0 : i32, i32
  }
  func.func @transform_2(%arg0: i32, %arg1: i32) -> (i32, i32) {
    %c0_i32 = arith.constant 0 : i32
    %c0_i32_0 = arith.constant 0 : i32
    return %c0_i32, %arg0 : i32, i32
  }
  func.func @transform_3(%arg0: i32, %arg1: i32) -> (i32, i32) {
    %c0_i32 = arith.constant 0 : i32
    %c0_i32_0 = arith.constant 0 : i32
    return %c0_i32, %arg0 : i32, i32
  }
  func.func @transform_4(%arg0: i32, %arg1: i32) -> (i32, i32) {
    %c0_i32 = arith.constant 0 : i32
    %c0_i32_0 = arith.constant 0 : i32
    return %c0_i32, %arg0 : i32, i32
  }
}

</mosaic_0001>

<llo_original>
// kernel: tpu_custom_call.1
$region0: #{tpu_custom_call.1}
  #allocation0 [shape = 'u32[]', space=smem, size = 0x4, offset = 0x4, fixed_abs, tag = 'smem constant byte address 0x4 - core index']
  #allocation1 [shape = 'u32[72,128]{1,0:T(1,128)}', space=vmem, size = 0x9000, scoped, tag = 'internal scratch']
  %s0 = inlined_call_operand.hbm [shape: bf16[128,256], index: 0, kind: input, shape index: {}]
  %s1 = inlined_call_operand.hbm [shape: bf16[256,128], index: 1, kind: input, shape index: {}]
  %s2 = inlined_call_operand.vmem [shape: f32[1,128], index: 2, kind: input, shape index: {}]
  %s3 = inlined_call_operand.vmem [shape: f32[1,128], index: 3, kind: input, shape index: {}]
  %s4 = inlined_call_operand.hbm [shape: f32[128,128], index: 4, kind: output, shape index: {}]
  %s5 = sld [smem:[#allocation0]]
  $region42: #{tpu_custom_call.1} parent=0
    _
  %s7 = ssub.s32 1, %s5
  %s8 = scalar_select 0, %s7, %s5
  $region1: #{tpu_custom_call.1} parent=0
    #allocation2 [shape = 'u8[65536]{0}', space=vmem, size = 0x10000, scoped, tag = 'input window, operand 0, single buffered']
    #allocation3 [shape = 's32[1]{0}', space=sflag, size = 0x4, scoped, tag = 'scoped memory for tpu_custom_call.1']
    #allocation4 [shape = 's32[1]{0}', space=sflag, size = 0x4, scoped, tag = 'scoped memory for tpu_custom_call.1']
    #allocation5 [shape = 'u8[65536]{0}', space=vmem, size = 0x10000, scoped, tag = 'input window, operand 1, single buffered']
    #allocation6 [shape = 's32[1]{0}', space=sflag, size = 0x4, scoped, tag = 'scoped memory for tpu_custom_call.1']
    #allocation7 [shape = 'u8[65536]{0}', space=vmem, size = 0x10000, scoped, tag = 'output window, operand 0, single buffered']
    %9 = vsyncpa [#allocation3], 0
    %10 = vsyncpa [#allocation6], 0
    %11 = vsyncpa [#allocation4], 0
    // Predicated region
    $region2: #{tpu_custom_call.1} parent=1 // pred_check
      _
    $region3: #{tpu_custom_call.1} parent=1 // pred_check_branch
      %13 = sbr.rel (0) target = $region5
    $region4: #{tpu_custom_call.1} parent=1 // pred_region
      %15 = vsyncadd [#allocation3], 0
      %s16 = sshll.u32 %s0, 4
      %s17 = int_to_ptr.hbm [resolvable:$true] %s16
      %s18 = sshll.u32 [#allocation2], 4
      %s19 = int_to_ptr.vmem [resolvable:$true] %s18
      %24 = dma.hbm_to_vmem [thread:$0]  %s17, 2048, %s19, [#allocation3], 128, 128, 8
    $region5: #{tpu_custom_call.1} parent=1 // pred_fallthru
      _
    // Predicated region
    $region6: #{tpu_custom_call.1} parent=1 // pred_check
      _
    $region7: #{tpu_custom_call.1} parent=1 // pred_check_branch
      %26 = sbr.rel (0) target = $region9
    $region8: #{tpu_custom_call.1} parent=1 // pred_region
      %28 = vsyncadd [#allocation6], 0
      %s29 = sshll.u32 %s1, 4
      %s30 = int_to_ptr.hbm [resolvable:$true] %s29
      %s31 = sshll.u32 [#allocation5], 4
      %s32 = int_to_ptr.vmem [resolvable:$true] %s31
      %37 = dma.hbm_to_vmem [thread:$0]  %s30, 2048, %s32, [#allocation6], 64, 64, 4
    $region9: #{tpu_custom_call.1} parent=1 // pred_fallthru
      _
    // Predicated region
    $region10: #{tpu_custom_call.1} parent=1 // pred_check
      _
    $region11: #{tpu_custom_call.1} parent=1 // pred_check_branch
      %39 = sbr.rel (0) target = $region13
    $region12: #{tpu_custom_call.1} parent=1 // pred_region
      _
    $region13: #{tpu_custom_call.1} parent=1 // pred_fallthru
      _
    // Predicated region
    $region14: #{tpu_custom_call.1} parent=1 // pred_check
      _
    $region15: #{tpu_custom_call.1} parent=1 // pred_check_branch
      %41 = sbr.rel (0) target = $region17
    $region16: #{tpu_custom_call.1} parent=1 // pred_region
      _
    $region17: #{tpu_custom_call.1} parent=1 // pred_fallthru
      _
    // Predicated region
    $region18: #{tpu_custom_call.1} parent=1 // pred_check
      _
    $region19: #{tpu_custom_call.1} parent=1 // pred_check_branch
      %43 = sbr.rel (0) target = $region21
    $region20: #{tpu_custom_call.1} parent=1 // pred_region
      %45 = dma.done [#allocation3], 2048
    $region21: #{tpu_custom_call.1} parent=1 // pred_fallthru
      _
    // Predicated region
    $region22: #{tpu_custom_call.1} parent=1 // pred_check
      _
    $region23: #{tpu_custom_call.1} parent=1 // pred_check_branch
      %47 = sbr.rel (0) target = $region25
    $region24: #{tpu_custom_call.1} parent=1 // pred_region
      %49 = dma.done [#allocation6], 2048
    $region25: #{tpu_custom_call.1} parent=1 // pred_fallthru
      _
    %p50 = scmp.eq.s32.totalorder 0, 0
    // Predicated region
    $region26: #{tpu_custom_call.1} parent=1 // pred_check
      %p51 = pneg %p50
    $region27: #{tpu_custom_call.1} parent=1 // pred_check_branch
      %53 = sbr.rel (%p51) target = $region29
    $region28: #{tpu_custom_call.1} parent=1 // pred_region
      %54 = vst [vmem:[#allocation7] sm:$0xff] 0.0
      %55 = vst [vmem:[#allocation7 + $0x8] sm:$0xff] 0.0
      %56 = vst [vmem:[#allocation7 + $0x10] sm:$0xff] 0.0
      %57 = vst [vmem:[#allocation7 + $0x18] sm:$0xff] 0.0
      %58 = vst [vmem:[#allocation7 + $0x20] sm:$0xff] 0.0
      %59 = vst [vmem:[#allocation7 + $0x28] sm:$0xff] 0.0
      %60 = vst [vmem:[#allocation7 + $0x30] sm:$0xff] 0.0
      %61 = vst [vmem:[#allocation7 + $0x38] sm:$0xff] 0.0
      %62 = vst [vmem:[#allocation7 + $0x40] sm:$0xff] 0.0
      %63 = vst [vmem:[#allocation7 + $0x48] sm:$0xff] 0.0
      %64 = vst [vmem:[#allocation7 + $0x50] sm:$0xff] 0.0
      %65 = vst [vmem:[#allocation7 + $0x58] sm:$0xff] 0.0
      %66 = vst [vmem:[#allocation7 + $0x60] sm:$0xff] 0.0
      %67 = vst [vmem:[#allocation7 + $0x68] sm:$0xff] 0.0
      %68 = vst [vmem:[#allocation7 + $0x70] sm:$0xff] 0.0
      %69 = vst [vmem:[#allocation7 + $0x78] sm:$0xff] 0.0
    $region29: #{tpu_custom_call.1} parent=1 // pred_fallthru
      _
    %v70 = vld [vmem:[#allocation7] sm:$0xff]
    %v71 = vld [vmem:[#allocation7 + $0x8] sm:$0xff]
    %v72 = vld [vmem:[#allocation7 + $0x10] sm:$0xff]
    %v73 = vld [vmem:[#allocation7 + $0x18] sm:$0xff]
    %v74 = vld [vmem:[#allocation7 + $0x20] sm:$0xff]
    %v75 = vld [vmem:[#allocation7 + $0x28] sm:$0xff]
    %v76 = vld [vmem:[#allocation7 + $0x30] sm:$0xff]
    %v77 = vld [vmem:[#allocation7 + $0x38] sm:$0xff]
    %v78 = vld [vmem:[#allocation7 + $0x40] sm:$0xff]
    %v79 = vld [vmem:[#allocation7 + $0x48] sm:$0xff]
    %v80 = vld [vmem:[#allocation7 + $0x50] sm:$0xff]
    %v81 = vld [vmem:[#allocation7 + $0x58] sm:$0xff]
    %v82 = vld [vmem:[#allocation7 + $0x60] sm:$0xff]
    %v83 = vld [vmem:[#allocation7 + $0x68] sm:$0xff]
    %v84 = vld [vmem:[#allocation7 + $0x70] sm:$0xff]
    %v85 = vld [vmem:[#allocation7 + $0x78] sm:$0xff]
    %v86 = vld [vmem:[#allocation2] sm:$0xff]
    %v87 = vld [vmem:[#allocation2 + $0x8] sm:$0xff]
    %v88 = vld [vmem:[#allocation2 + $0x10] sm:$0xff]
    %v89 = vld [vmem:[#allocation2 + $0x18] sm:$0xff]
    %v90 = vld [vmem:[#allocation2 + $0x20] sm:$0xff]
    %v91 = vld [vmem:[#allocation2 + $0x28] sm:$0xff]
    %v92 = vld [vmem:[#allocation2 + $0x30] sm:$0xff]
    %v93 = vld [vmem:[#allocation2 + $0x38] sm:$0xff]
    %v94 = vld [vmem:[#allocation2 + $0x40] sm:$0xff]
    %v95 = vld [vmem:[#allocation2 + $0x48] sm:$0xff]
    %v96 = vld [vmem:[#allocation2 + $0x50] sm:$0xff]
    %v97 = vld [vmem:[#allocation2 + $0x58] sm:$0xff]
    %v98 = vld [vmem:[#allocation2 + $0x60] sm:$0xff]
    %v99 = vld [vmem:[#allocation2 + $0x68] sm:$0xff]
    %v100 = vld [vmem:[#allocation2 + $0x70] sm:$0xff]
    %v101 = vld [vmem:[#allocation2 + $0x78] sm:$0xff]
    %v102 = vld [vmem:[#allocation5] sm:$0xf]
    %v103 = vld [vmem:[#allocation5 + $0x4] sm:$0xf]
    %v104 = vld [vmem:[#allocation5 + $0x8] sm:$0xf]
    %v105 = vld [vmem:[#allocation5 + $0xc] sm:$0xf]
    %v106 = vld [vmem:[#allocation5 + $0x10] sm:$0xf]
    %v107 = vld [vmem:[#allocation5 + $0x14] sm:$0xf]
    %v108 = vld [vmem:[#allocation5 + $0x18] sm:$0xf]
    %v109 = vld [vmem:[#allocation5 + $0x1c] sm:$0xf]
    %v110 = vld [vmem:[#allocation5 + $0x20] sm:$0xf]
    %v111 = vld [vmem:[#allocation5 + $0x24] sm:$0xf]
    %v112 = vld [vmem:[#allocation5 + $0x28] sm:$0xf]
    %v113 = vld [vmem:[#allocation5 + $0x2c] sm:$0xf]
    %v114 = vld [vmem:[#allocation5 + $0x30] sm:$0xf]
    %v115 = vld [vmem:[#allocation5 + $0x34] sm:$0xf]
    %v116 = vld [vmem:[#allocation5 + $0x38] sm:$0xf]
    %v117 = vld [vmem:[#allocation5 + $0x3c] sm:$0xf]
    %v118 = vld [vmem:[#allocation5 + $0x40] sm:$0xf]
    %v119 = vld [vmem:[#allocation5 + $0x44] sm:$0xf]
    %v120 = vld [vmem:[#allocation5 + $0x48] sm:$0xf]
    %v121 = vld [vmem:[#allocation5 + $0x4c] sm:$0xf]
    %v122 = vld [vmem:[#allocation5 + $0x50] sm:$0xf]
    %v123 = vld [vmem:[#allocation5 + $0x54] sm:$0xf]
    %v124 = vld [vmem:[#allocation5 + $0x58] sm:$0xf]
    %v125 = vld [vmem:[#allocation5 + $0x5c] sm:$0xf]
    %v126 = vld [vmem:[#allocation5 + $0x60] sm:$0xf]
    %v127 = vld [vmem:[#allocation5 + $0x64] sm:$0xf]
    %v128 = vld [vmem:[#allocation5 + $0x68] sm:$0xf]
    %v129 = vld [vmem:[#allocation5 + $0x6c] sm:$0xf]
    %v130 = vld [vmem:[#allocation5 + $0x70] sm:$0xf]
    %v131 = vld [vmem:[#allocation5 + $0x74] sm:$0xf]
    %v132 = vld [vmem:[#allocation5 + $0x78] sm:$0xf]
    %v133 = vld [vmem:[#allocation5 + $0x7c] sm:$0xf]
    %v150 = vunpack.c.l.b16 %v86
    %v151 = vunpack.c.h.b16 %v86
    %v152 = vunpack.c.l.b16 %v87
    %v153 = vunpack.c.h.b16 %v87
    %v154 = vunpack.c.l.b16 %v88
    %v155 = vunpack.c.h.b16 %v88
    %v156 = vunpack.c.l.b16 %v89
    %v157 = vunpack.c.h.b16 %v89
    %v158 = vunpack.c.l.b16 %v90
    %v159 = vunpack.c.h.b16 %v90
    %v160 = vunpack.c.l.b16 %v91
    %v161 = vunpack.c.h.b16 %v91
    %v162 = vunpack.c.l.b16 %v92
    %v163 = vunpack.c.h.b16 %v92
    %v164 = vunpack.c.l.b16 %v93
    %v165 = vunpack.c.h.b16 %v93
    %v166 = vunpack.c.l.b16 %v94
    %v167 = vunpack.c.h.b16 %v94
    %v168 = vunpack.c.l.b16 %v95
    %v169 = vunpack.c.h.b16 %v95
    %v170 = vunpack.c.l.b16 %v96
    %v171 = vunpack.c.h.b16 %v96
    %v172 = vunpack.c.l.b16 %v97
    %v173 = vunpack.c.h.b16 %v97
    %v174 = vunpack.c.l.b16 %v98
    %v175 = vunpack.c.h.b16 %v98
    %v176 = vunpack.c.l.b16 %v99
    %v177 = vunpack.c.h.b16 %v99
    %v178 = vunpack.c.l.b16 %v100
    %v179 = vunpack.c.h.b16 %v100
    %v180 = vunpack.c.l.b16 %v101
    %v181 = vunpack.c.h.b16 %v101
    %v182 = vpack.c.b16 %v152, %v150
    %v183 = vpack.c.b16 %v153, %v151
    %v184 = vpack.c.b16 %v156, %v154
    %v185 = vpack.c.b16 %v157, %v155
    %v186 = vpack.c.b16 %v160, %v158
    %v187 = vpack.c.b16 %v161, %v159
    %v188 = vpack.c.b16 %v164, %v162
    %v189 = vpack.c.b16 %v165, %v163
    %v190 = vpack.c.b16 %v168, %v166
    %v191 = vpack.c.b16 %v169, %v167
    %v192 = vpack.c.b16 %v172, %v170
    %v193 = vpack.c.b16 %v173, %v171
    %v194 = vpack.c.b16 %v176, %v174
    %v195 = vpack.c.b16 %v177, %v175
    %v196 = vpack.c.b16 %v180, %v178
    %v197 = vpack.c.b16 %v181, %v179
    %v246 = vunpack.c.l.b16 %v102
    %v247 = vunpack.c.l.b16 %v103
    %v248 = vunpack.c.l.b16 %v104
    %v249 = vunpack.c.l.b16 %v105
    %v250 = vunpack.c.l.b16 %v106
    %v251 = vunpack.c.l.b16 %v107
    %v252 = vunpack.c.l.b16 %v108
    %v253 = vunpack.c.l.b16 %v109
    %v254 = vunpack.c.l.b16 %v110
    %v255 = vunpack.c.l.b16 %v111
    %v256 = vunpack.c.l.b16 %v112
    %v257 = vunpack.c.l.b16 %v113
    %v258 = vunpack.c.l.b16 %v114
    %v259 = vunpack.c.l.b16 %v115
    %v260 = vunpack.c.l.b16 %v116
    %v261 = vunpack.c.l.b16 %v117
    %v262 = vunpack.c.l.b16 %v118
    %v263 = vunpack.c.l.b16 %v119
    %v264 = vunpack.c.l.b16 %v120
    %v265 = vunpack.c.l.b16 %v121
    %v266 = vunpack.c.l.b16 %v122
    %v267 = vunpack.c.l.b16 %v123
    %v268 = vunpack.c.l.b16 %v124
    %v269 = vunpack.c.l.b16 %v125
    %v270 = vunpack.c.l.b16 %v126
    %v271 = vunpack.c.l.b16 %v127
    %v272 = vunpack.c.l.b16 %v128
    %v273 = vunpack.c.l.b16 %v129
    %v274 = vunpack.c.l.b16 %v130
    %v275 = vunpack.c.l.b16 %v131
    %v276 = vunpack.c.l.b16 %v132
    %v277 = vunpack.c.l.b16 %v133
    %v278 = vpack.c.b16 %v247, %v246
    %v279 = vpack.c.b16 %v249, %v248
    %v280 = vpack.c.b16 %v251, %v250
    %v281 = vpack.c.b16 %v253, %v252
    %v282 = vpack.c.b16 %v255, %v254
    %v283 = vpack.c.b16 %v257, %v256
    %v284 = vpack.c.b16 %v259, %v258
    %v285 = vpack.c.b16 %v261, %v260
    %v286 = vpack.c.b16 %v263, %v262
    %v287 = vpack.c.b16 %v265, %v264
    %v288 = vpack.c.b16 %v267, %v266
    %v289 = vpack.c.b16 %v269, %v268
    %v290 = vpack.c.b16 %v271, %v270
    %v291 = vpack.c.b16 %v273, %v272
    %v292 = vpack.c.b16 %v275, %v274
    %v293 = vpack.c.b16 %v277, %v276
    %310 = vmatpush.bf16.msra.mxu0 %v285
    %311 = vmatpush.bf16.msra.mxu0 %v284
    %312 = vmatpush.bf16.msra.mxu0 %v283
    %313 = vmatpush.bf16.msra.mxu0 %v282
    %314 = vmatpush.bf16.msra.mxu0 %v281
    %315 = vmatpush.bf16.msra.mxu0 %v280
    %316 = vmatpush.bf16.msra.mxu0 %v279
    %317 = vmatpush.bf16.msra.mxu0 %v278
    %318 = vmatmul.bf16.gmra.mxu0 %v182
    %v319 = vpop.f32.mrf.mxu0
    %v320 = vadd.f32 0.0, %v319
    %v321 = vpop.f32.mrf.mxu0
    %v322 = vadd.f32 0.0, %v321
    %323 = vmatmul.bf16.gmra.mxu0 %v184
    %v324 = vpop.f32.mrf.mxu0
    %v325 = vadd.f32 0.0, %v324
    %v326 = vpop.f32.mrf.mxu0
    %v327 = vadd.f32 0.0, %v326
    %328 = vmatmul.bf16.gmra.mxu0 %v186
    %v329 = vpop.f32.mrf.mxu0
    %v330 = vadd.f32 0.0, %v329
    %v331 = vpop.f32.mrf.mxu0
    %v332 = vadd.f32 0.0, %v331
    %333 = vmatmul.bf16.gmra.mxu0 %v188
    %v334 = vpop.f32.mrf.mxu0
    %v335 = vadd.f32 0.0, %v334
    %v336 = vpop.f32.mrf.mxu0
    %v337 = vadd.f32 0.0, %v336
    %338 = vmatmul.bf16.gmra.mxu0 %v190
    %v339 = vpop.f32.mrf.mxu0
    %v340 = vadd.f32 0.0, %v339
    %v341 = vpop.f32.mrf.mxu0
    %v342 = vadd.f32 0.0, %v341
    %343 = vmatmul.bf16.gmra.mxu0 %v192
    %v344 = vpop.f32.mrf.mxu0
    %v345 = vadd.f32 0.0, %v344
    %v346 = vpop.f32.mrf.mxu0
    %v347 = vadd.f32 0.0, %v346
    %348 = vmatmul.bf16.gmra.mxu0 %v194
    %v349 = vpop.f32.mrf.mxu0
    %v350 = vadd.f32 0.0, %v349
    %v351 = vpop.f32.mrf.mxu0
    %v352 = vadd.f32 0.0, %v351
    %353 = vmatmul.bf16.gmra.mxu0 %v196
    %v354 = vpop.f32.mrf.mxu0
    %v355 = vadd.f32 0.0, %v354
    %v356 = vpop.f32.mrf.mxu0
    %v357 = vadd.f32 0.0, %v356
    %358 = vdwg.mxu0
    %359 = vmatpush.bf16.msra.mxu0 %v293
    %360 = vmatpush.bf16.msra.mxu0 %v292
    %361 = vmatpush.bf16.msra.mxu0 %v291
    %362 = vmatpush.bf16.msra.mxu0 %v290
    %363 = vmatpush.bf16.msra.mxu0 %v289
    %364 = vmatpush.bf16.msra.mxu0 %v288
    %365 = vmatpush.bf16.msra.mxu0 %v287
    %366 = vmatpush.bf16.msra.mxu0 %v286
    %367 = vmatmul.bf16.gmra.mxu0 %v183
    %v368 = vpop.f32.mrf.mxu0
    %v369 = vadd.f32 %v320, %v368
    %v370 = vpop.f32.mrf.mxu0
    %v371 = vadd.f32 %v322, %v370
    %372 = vmatmul.bf16.gmra.mxu0 %v185
    %v373 = vpop.f32.mrf.mxu0
    %v374 = vadd.f32 %v325, %v373
    %v375 = vpop.f32.mrf.mxu0
    %v376 = vadd.f32 %v327, %v375
    %377 = vmatmul.bf16.gmra.mxu0 %v187
    %v378 = vpop.f32.mrf.mxu0
    %v379 = vadd.f32 %v330, %v378
    %v380 = vpop.f32.mrf.mxu0
    %v381 = vadd.f32 %v332, %v380
    %382 = vmatmul.bf16.gmra.mxu0 %v189
    %v383 = vpop.f32.mrf.mxu0
    %v384 = vadd.f32 %v335, %v383
    %v385 = vpop.f32.mrf.mxu0
    %v386 = vadd.f32 %v337, %v385
    %387 = vmatmul.bf16.gmra.mxu0 %v191
    %v388 = vpop.f32.mrf.mxu0
    %v389 = vadd.f32 %v340, %v388
    %v390 = vpop.f32.mrf.mxu0
    %v391 = vadd.f32 %v342, %v390
    %392 = vmatmul.bf16.gmra.mxu0 %v193
    %v393 = vpop.f32.mrf.mxu0
    %v394 = vadd.f32 %v345, %v393
    %v395 = vpop.f32.mrf.mxu0
    %v396 = vadd.f32 %v347, %v395
    %397 = vmatmul.bf16.gmra.mxu0 %v195
    %v398 = vpop.f32.mrf.mxu0
    %v399 = vadd.f32 %v350, %v398
    %v400 = vpop.f32.mrf.mxu0
    %v401 = vadd.f32 %v352, %v400
    %402 = vmatmul.bf16.gmra.mxu0 %v197
    %v403 = vpop.f32.mrf.mxu0
    %v404 = vadd.f32 %v355, %v403
    %v405 = vpop.f32.mrf.mxu0
    %v406 = vadd.f32 %v357, %v405
    %407 = vdwg.mxu0
    %v408 = vadd.f32 %v70, %v369
    %v409 = vadd.f32 %v71, %v371
    %v410 = vadd.f32 %v72, %v374
    %v411 = vadd.f32 %v73, %v376
    %v412 = vadd.f32 %v74, %v379
    %v413 = vadd.f32 %v75, %v381
    %v414 = vadd.f32 %v76, %v384
    %v415 = vadd.f32 %v77, %v386
    %v416 = vadd.f32 %v78, %v389
    %v417 = vadd.f32 %v79, %v391
    %v418 = vadd.f32 %v80, %v394
    %v419 = vadd.f32 %v81, %v396
    %v420 = vadd.f32 %v82, %v399
    %v421 = vadd.f32 %v83, %v401
    %v422 = vadd.f32 %v84, %v404
    %v423 = vadd.f32 %v85, %v406
    %424 = vst [vmem:[#allocation7] sm:$0xff] %v408
    %425 = vst [vmem:[#allocation7 + $0x8] sm:$0xff] %v409
    %426 = vst [vmem:[#allocation7 + $0x10] sm:$0xff] %v410
    %427 = vst [vmem:[#allocation7 + $0x18] sm:$0xff] %v411
    %428 = vst [vmem:[#allocation7 + $0x20] sm:$0xff] %v412
    %429 = vst [vmem:[#allocation7 + $0x28] sm:$0xff] %v413
    %430 = vst [vmem:[#allocation7 + $0x30] sm:$0xff] %v414
    %431 = vst [vmem:[#allocation7 + $0x38] sm:$0xff] %v415
    %432 = vst [vmem:[#allocation7 + $0x40] sm:$0xff] %v416
    %433 = vst [vmem:[#allocation7 + $0x48] sm:$0xff] %v417
    %434 = vst [vmem:[#allocation7 + $0x50] sm:$0xff] %v418
    %435 = vst [vmem:[#allocation7 + $0x58] sm:$0xff] %v419
    %436 = vst [vmem:[#allocation7 + $0x60] sm:$0xff] %v420
    %437 = vst [vmem:[#allocation7 + $0x68] sm:$0xff] %v421
    %438 = vst [vmem:[#allocation7 + $0x70] sm:$0xff] %v422
    %439 = vst [vmem:[#allocation7 + $0x78] sm:$0xff] %v423
    // Predicated region
    $region30: #{tpu_custom_call.1} parent=1 // pred_check
      %p440 = pneg %p50
    $region31: #{tpu_custom_call.1} parent=1 // pred_check_branch
      %442 = sbr.rel (%p440) target = $region33
    $region32: #{tpu_custom_call.1} parent=1 // pred_region
      %v443 = vld [vmem:[#allocation7] sm:$0xff]
      %v444 = vld [vmem:[#allocation7 + $0x8] sm:$0xff]
      %v445 = vld [vmem:[#allocation7 + $0x10] sm:$0xff]
      %v446 = vld [vmem:[#allocation7 + $0x18] sm:$0xff]
      %v447 = vld [vmem:[#allocation7 + $0x20] sm:$0xff]
      %v448 = vld [vmem:[#allocation7 + $0x28] sm:$0xff]
      %v449 = vld [vmem:[#allocation7 + $0x30] sm:$0xff]
      %v450 = vld [vmem:[#allocation7 + $0x38] sm:$0xff]
      %v451 = vld [vmem:[#allocation7 + $0x40] sm:$0xff]
      %v452 = vld [vmem:[#allocation7 + $0x48] sm:$0xff]
      %v453 = vld [vmem:[#allocation7 + $0x50] sm:$0xff]
      %v454 = vld [vmem:[#allocation7 + $0x58] sm:$0xff]
      %v455 = vld [vmem:[#allocation7 + $0x60] sm:$0xff]
      %v456 = vld [vmem:[#allocation7 + $0x68] sm:$0xff]
      %v457 = vld [vmem:[#allocation7 + $0x70] sm:$0xff]
      %v458 = vld [vmem:[#allocation7 + $0x78] sm:$0xff]
      %v459 = vlaneseq
      %v460 = vshrl.u32 %v459, 7
      %v461 = vadd.s32 %v460, 8
      %v462 = vadd.s32 %v460, 16
      %v463 = vadd.s32 %v460, 24
      %v464 = vadd.s32 %v460, 32
      %v465 = vadd.s32 %v460, 40
      %v466 = vadd.s32 %v460, 48
      %v467 = vadd.s32 %v460, 56
      %v468 = vadd.s32 %v460, 64
      %v469 = vadd.s32 %v460, 72
      %v470 = vadd.s32 %v460, 80
      %v471 = vadd.s32 %v460, 88
      %v472 = vadd.s32 %v460, 96
      %v473 = vadd.s32 %v460, 104
      %v474 = vadd.s32 %v460, 112
      %v475 = vadd.s32 %v460, 120
      %vm476 = vcmp.lt.s32.totalorder %v460, 128
      %vm477 = vcmp.lt.s32.totalorder %v461, 128
      %vm478 = vcmp.lt.s32.totalorder %v462, 128
      %vm479 = vcmp.lt.s32.totalorder %v463, 128
      %vm480 = vcmp.lt.s32.totalorder %v464, 128
      %vm481 = vcmp.lt.s32.totalorder %v465, 128
      %vm482 = vcmp.lt.s32.totalorder %v466, 128
      %vm483 = vcmp.lt.s32.totalorder %v467, 128
      %vm484 = vcmp.lt.s32.totalorder %v468, 128
      %vm485 = vcmp.lt.s32.totalorder %v469, 128
      %vm486 = vcmp.lt.s32.totalorder %v470, 128
      %vm487 = vcmp.lt.s32.totalorder %v471, 128
      %vm488 = vcmp.lt.s32.totalorder %v472, 128
      %vm489 = vcmp.lt.s32.totalorder %v473, 128
      %vm490 = vcmp.lt.s32.totalorder %v474, 128
      %vm491 = vcmp.lt.s32.totalorder %v475, 128
      %v492 = vsel %vm476, 1, 0
      %v493 = vsel %vm477, 1, 0
      %v494 = vsel %vm478, 1, 0
      %v495 = vsel %vm479, 1, 0
      %v496 = vsel %vm480, 1, 0
      %v497 = vsel %vm481, 1, 0
      %v498 = vsel %vm482, 1, 0
      %v499 = vsel %vm483, 1, 0
      %v500 = vsel %vm484, 1, 0
      %v501 = vsel %vm485, 1, 0
      %v502 = vsel %vm486, 1, 0
      %v503 = vsel %vm487, 1, 0
      %v504 = vsel %vm488, 1, 0
      %v505 = vsel %vm489, 1, 0
      %v506 = vsel %vm490, 1, 0
      %v507 = vsel %vm491, 1, 0
      %v508 = vcvt.s32.f32 %v492
      %v509 = vcvt.s32.f32 %v493
      %v510 = vcvt.s32.f32 %v494
      %v511 = vcvt.s32.f32 %v495
      %v512 = vcvt.s32.f32 %v496
      %v513 = vcvt.s32.f32 %v497
      %v514 = vcvt.s32.f32 %v498
      %v515 = vcvt.s32.f32 %v499
      %v516 = vcvt.s32.f32 %v500
      %v517 = vcvt.s32.f32 %v501
      %v518 = vcvt.s32.f32 %v502
      %v519 = vcvt.s32.f32 %v503
      %v520 = vcvt.s32.f32 %v504
      %v521 = vcvt.s32.f32 %v505
      %v522 = vcvt.s32.f32 %v506
      %v523 = vcvt.s32.f32 %v507
      %v524 = vmul.f32 %v443, %v508
      %v525 = vmul.f32 %v444, %v509
      %v526 = vmul.f32 %v445, %v510
      %v527 = vmul.f32 %v446, %v511
      %v528 = vmul.f32 %v447, %v512
      %v529 = vmul.f32 %v448, %v513
      %v530 = vmul.f32 %v449, %v514
      %v531 = vmul.f32 %v450, %v515
      %v532 = vmul.f32 %v451, %v516
      %v533 = vmul.f32 %v452, %v517
      %v534 = vmul.f32 %v453, %v518
      %v535 = vmul.f32 %v454, %v519
      %v536 = vmul.f32 %v455, %v520
      %v537 = vmul.f32 %v456, %v521
      %v538 = vmul.f32 %v457, %v522
      %v539 = vmul.f32 %v458, %v523
      %v540 = vadd.f32 %v524, %v525
      %v541 = vadd.f32 %v540, %v526
      %v542 = vadd.f32 %v541, %v527
      %v543 = vadd.f32 %v542, %v528
      %v544 = vadd.f32 %v543, %v529
      %v545 = vadd.f32 %v544, %v530
      %v546 = vadd.f32 %v545, %v531
      %v547 = vadd.f32 %v546, %v532
      %v548 = vadd.f32 %v547, %v533
      %v549 = vadd.f32 %v548, %v534
      %v550 = vadd.f32 %v549, %v535
      %v551 = vadd.f32 %v550, %v536
      %v552 = vadd.f32 %v551, %v537
      %v553 = vadd.f32 %v552, %v538
      %v554 = vadd.f32 %v553, %v539
      %v555 = vrot.slane %v554, 4
      %v556 = vadd.f32 %v554, %v555
      %v557 = vrot.slane %v556, 2
      %v558 = vadd.f32 %v556, %v557
      %v559 = vrot.slane %v558, 1
      %v560 = vadd.f32 %v558, %v559
      %v561 = vmul.f32 %v560, 0.0078125
      %v562 = vsub.f32 %v443, %v561
      %v563 = vsub.f32 %v444, %v561
      %v564 = vsub.f32 %v445, %v561
      %v565 = vsub.f32 %v446, %v561
      %v566 = vsub.f32 %v447, %v561
      %v567 = vsub.f32 %v448, %v561
      %v568 = vsub.f32 %v449, %v561
      %v569 = vsub.f32 %v450, %v561
      %v570 = vsub.f32 %v451, %v561
      %v571 = vsub.f32 %v452, %v561
      %v572 = vsub.f32 %v453, %v561
      %v573 = vsub.f32 %v454, %v561
      %v574 = vsub.f32 %v455, %v561
      %v575 = vsub.f32 %v456, %v561
      %v576 = vsub.f32 %v457, %v561
      %v577 = vsub.f32 %v458, %v561
      %v578 = vmul.f32 %v562, %v562
      %v579 = vmul.f32 %v563, %v563
      %v580 = vmul.f32 %v564, %v564
      %v581 = vmul.f32 %v565, %v565
      %v582 = vmul.f32 %v566, %v566
      %v583 = vmul.f32 %v567, %v567
      %v584 = vmul.f32 %v568, %v568
      %v585 = vmul.f32 %v569, %v569
      %v586 = vmul.f32 %v570, %v570
      %v587 = vmul.f32 %v571, %v571
      %v588 = vmul.f32 %v572, %v572
      %v589 = vmul.f32 %v573, %v573
      %v590 = vmul.f32 %v574, %v574
      %v591 = vmul.f32 %v575, %v575
      %v592 = vmul.f32 %v576, %v576
      %v593 = vmul.f32 %v577, %v577
      %v594 = vmul.f32 %v578, %v508
      %v595 = vmul.f32 %v579, %v509
      %v596 = vmul.f32 %v580, %v510
      %v597 = vmul.f32 %v581, %v511
      %v598 = vmul.f32 %v582, %v512
      %v599 = vmul.f32 %v583, %v513
      %v600 = vmul.f32 %v584, %v514
      %v601 = vmul.f32 %v585, %v515
      %v602 = vmul.f32 %v586, %v516
      %v603 = vmul.f32 %v587, %v517
      %v604 = vmul.f32 %v588, %v518
      %v605 = vmul.f32 %v589, %v519
      %v606 = vmul.f32 %v590, %v520
      %v607 = vmul.f32 %v591, %v521
      %v608 = vmul.f32 %v592, %v522
      %v609 = vmul.f32 %v593, %v523
      %v610 = vadd.f32 %v594, %v595
      %v611 = vadd.f32 %v610, %v596
      %v612 = vadd.f32 %v611, %v597
      %v613 = vadd.f32 %v612, %v598
      %v614 = vadd.f32 %v613, %v599
      %v615 = vadd.f32 %v614, %v600
      %v616 = vadd.f32 %v615, %v601
      %v617 = vadd.f32 %v616, %v602
      %v618 = vadd.f32 %v617, %v603
      %v619 = vadd.f32 %v618, %v604
      %v620 = vadd.f32 %v619, %v605
      %v621 = vadd.f32 %v620, %v606
      %v622 = vadd.f32 %v621, %v607
      %v623 = vadd.f32 %v622, %v608
      %v624 = vadd.f32 %v623, %v609
      %v625 = vrot.slane %v624, 4
      %v626 = vadd.f32 %v624, %v625
      %v627 = vrot.slane %v626, 2
      %v628 = vadd.f32 %v626, %v627
      %v629 = vrot.slane %v628, 1
      %v630 = vadd.f32 %v628, %v629
      %v631 = vmul.f32 %v630, 0.0078125
      %v632 = vadd.f32 %v631, 1e-05
      %v633 = vrsqrt.pop %v632
      %v634 = vmul.f32 %v633, %v632
      %v635 = vmul.f32 %v634, %v633
      %v636 = vmul.f32 0.5, %v635
      %v637 = vsub.f32 1.5, %v636
      %v638 = vmul.f32 %v633, %v637
      %vm639 = vweird.f32 %v632
      %vm640 = vweird.f32 %v633
      %vm641 = vmor %vm639, %vm640
      %v642 = vsel %vm641, %v633, %v638
      %v643 = vmul.f32 %v562, %v642
      %v644 = vmul.f32 %v563, %v642
      %v645 = vmul.f32 %v564, %v642
      %v646 = vmul.f32 %v565, %v642
      %v647 = vmul.f32 %v566, %v642
      %v648 = vmul.f32 %v567, %v642
      %v649 = vmul.f32 %v568, %v642
      %v650 = vmul.f32 %v569, %v642
      %v651 = vmul.f32 %v570, %v642
      %v652 = vmul.f32 %v571, %v642
      %v653 = vmul.f32 %v572, %v642
      %v654 = vmul.f32 %v573, %v642
      %v655 = vmul.f32 %v574, %v642
      %v656 = vmul.f32 %v575, %v642
      %v657 = vmul.f32 %v576, %v642
      %v658 = vmul.f32 %v577, %v642
      %v659 = vld [vmem:[%s2] sm:$0x1]
      %v661 = vperm.slane %v659, 0
      %v663 = vmul.f32 %v643, %v661
      %v664 = vmul.f32 %v644, %v661
      %v665 = vmul.f32 %v645, %v661
      %v666 = vmul.f32 %v646, %v661
      %v667 = vmul.f32 %v647, %v661
      %v668 = vmul.f32 %v648, %v661
      %v669 = vmul.f32 %v649, %v661
      %v670 = vmul.f32 %v650, %v661
      %v671 = vmul.f32 %v651, %v661
      %v672 = vmul.f32 %v652, %v661
      %v673 = vmul.f32 %v653, %v661
      %v674 = vmul.f32 %v654, %v661
      %v675 = vmul.f32 %v655, %v661
      %v676 = vmul.f32 %v656, %v661
      %v677 = vmul.f32 %v657, %v661
      %v678 = vmul.f32 %v658, %v661
      %v679 = vld [vmem:[%s3] sm:$0x1]
      %v681 = vperm.slane %v679, 0
      %v683 = vadd.f32 %v663, %v681
      %v684 = vadd.f32 %v664, %v681
      %v685 = vadd.f32 %v665, %v681
      %v686 = vadd.f32 %v666, %v681
      %v687 = vadd.f32 %v667, %v681
      %v688 = vadd.f32 %v668, %v681
      %v689 = vadd.f32 %v669, %v681
      %v690 = vadd.f32 %v670, %v681
      %v691 = vadd.f32 %v671, %v681
      %v692 = vadd.f32 %v672, %v681
      %v693 = vadd.f32 %v673, %v681
      %v694 = vadd.f32 %v674, %v681
      %v695 = vadd.f32 %v675, %v681
      %v696 = vadd.f32 %v676, %v681
      %v697 = vadd.f32 %v677, %v681
      %v698 = vadd.f32 %v678, %v681
      %v699 = vmax.f32 %v683, 0.0
      %v700 = vmax.f32 %v684, 0.0
      %v701 = vmax.f32 %v685, 0.0
      %v702 = vmax.f32 %v686, 0.0
      %v703 = vmax.f32 %v687, 0.0
      %v704 = vmax.f32 %v688, 0.0
      %v705 = vmax.f32 %v689, 0.0
      %v706 = vmax.f32 %v690, 0.0
      %v707 = vmax.f32 %v691, 0.0
      %v708 = vmax.f32 %v692, 0.0
      %v709 = vmax.f32 %v693, 0.0
      %v710 = vmax.f32 %v694, 0.0
      %v711 = vmax.f32 %v695, 0.0
      %v712 = vmax.f32 %v696, 0.0
      %v713 = vmax.f32 %v697, 0.0
      %v714 = vmax.f32 %v698, 0.0
      %715 = vst [vmem:[#allocation7] sm:$0xff] %v699
      %716 = vst [vmem:[#allocation7 + $0x8] sm:$0xff] %v700
      %717 = vst [vmem:[#allocation7 + $0x10] sm:$0xff] %v701
      %718 = vst [vmem:[#allocation7 + $0x18] sm:$0xff] %v702
      %719 = vst [vmem:[#allocation7 + $0x20] sm:$0xff] %v703
      %720 = vst [vmem:[#allocation7 + $0x28] sm:$0xff] %v704
      %721 = vst [vmem:[#allocation7 + $0x30] sm:$0xff] %v705
      %722 = vst [vmem:[#allocation7 + $0x38] sm:$0xff] %v706
      %723 = vst [vmem:[#allocation7 + $0x40] sm:$0xff] %v707
      %724 = vst [vmem:[#allocation7 + $0x48] sm:$0xff] %v708
      %725 = vst [vmem:[#allocation7 + $0x50] sm:$0xff] %v709
      %726 = vst [vmem:[#allocation7 + $0x58] sm:$0xff] %v710
      %727 = vst [vmem:[#allocation7 + $0x60] sm:$0xff] %v711
      %728 = vst [vmem:[#allocation7 + $0x68] sm:$0xff] %v712
      %729 = vst [vmem:[#allocation7 + $0x70] sm:$0xff] %v713
      %730 = vst [vmem:[#allocation7 + $0x78] sm:$0xff] %v714
    $region33: #{tpu_custom_call.1} parent=1 // pred_fallthru
      _
    // Predicated region
    $region34: #{tpu_custom_call.1} parent=1 // pred_check
      _
    $region35: #{tpu_custom_call.1} parent=1 // pred_check_branch
      %732 = sbr.rel (0) target = $region37
    $region36: #{tpu_custom_call.1} parent=1 // pred_region
      %734 = vsyncadd [#allocation4], 0
      %s735 = sshll.u32 [#allocation7], 4
      %s736 = int_to_ptr.vmem [resolvable:$true] %s735
      %s737 = sshll.u32 %s4, 4
      %s738 = int_to_ptr.hbm [resolvable:$true] %s737
      %743 = dma.vmem_to_hbm [thread:$0]  %s736, 2048, %s738, [#allocation4], 128, 128, 8
    $region37: #{tpu_custom_call.1} parent=1 // pred_fallthru
      _
    // Predicated region
    $region38: #{tpu_custom_call.1} parent=1 // pred_check
      _
    $region39: #{tpu_custom_call.1} parent=1 // pred_check_branch
      %745 = sbr.rel (0) target = $region41
    $region40: #{tpu_custom_call.1} parent=1 // pred_region
      %747 = dma.done [#allocation4], 2048
    $region41: #{tpu_custom_call.1} parent=1 // pred_fallthru
      _
    %748 = vsyncpa [#allocation3], 1
    %749 = vsyncpa [#allocation6], 1
    %750 = vsyncpa [#allocation4], 1

</llo_original>
